<compile_context>
chip_gen: v6e
topology: v6e:2x2x1
jax: 0.10.0
libtpu: 0.0.40
codegen_flags: <defaults>
</compile_context>

<pallas_src>
import functools
import math

import jax
import jax.numpy as jnp
from jax import lax
from jax.experimental import pallas as pl
from jax.experimental.pallas import tpu as pltpu


def _cn_fused_kernel(*refs, n_layers, n_batch, L, K, pad_l, use_relu):
    """Fused CN stack: all Conv1d('same') layers + hidden ReLUs in one kernel.

    refs layout:
      refs[0]                      : x    (N*L, C0)            input (NLC flat)
      refs[1 + 2*i], refs[2 + 2*i] : w_i  (K, Cin_i, Cout_i),  b_i (1, Cout_i)
      refs[1 + 2*n_layers]         : o    (N*L, Cout_last)     output
      refs[2 + 2*n_layers]         : slab (N*Lp, Cmax)         shared VMEM stage
    """
    x_ref = refs[0]
    o_ref = refs[1 + 2 * n_layers]
    slab = refs[2 + 2 * n_layers]

    Lp = L + K - 1
    nrows = n_batch * Lp - (K - 1)

    # Zero the shared slab ONCE.  Halo rows are never written again, so they
    # provide the 'same' padding for every layer; valid rows are always
    # overwritten before they are read.
    slab[...] = jnp.zeros_like(slab)

    # Stage the flattened input into the slab's valid rows (per-batch halo).
    c0 = x_ref.shape[1]
    for b in range(n_batch):
        slab[b * Lp + pad_l: b * Lp + pad_l + L, :c0] = (
            x_ref[b * L:(b + 1) * L, :].astype(jnp.float32))

    for i in range(n_layers):
        w_ref = refs[1 + 2 * i]      # (K, Cin, Cout)
        b_ref = refs[2 + 2 * i]      # (1, Cout)
        cin = w_ref.shape[1]
        cout = w_ref.shape[2]
        is_last = (i == n_layers - 1)

        # One VMEM load of the active slab columns for this layer.
        sx = slab[:, :cin]                      # (N*Lp, Cin) value
        acc = jnp.zeros((nrows, cout), jnp.float32)
        # K is small & static: unrolled taps -> K tall MXU matmuls covering
        # the whole batch at once (junk rows at batch seams discarded below).
        for k in range(K):
            acc = acc + jnp.dot(sx[k:k + nrows, :], w_ref[k],
                                preferred_element_type=jnp.float32)
        acc = acc + b_ref[...]                  # (1, Cout) broadcasts
        if use_relu and not is_last:
            acc = jnp.maximum(acc, 0.0)

        if is_last:
            # Extract the valid rows per batch and store the final output.
            for b in range(n_batch):
                o_ref[b * L:(b + 1) * L, :] = (
                    acc[b * Lp:b * Lp + L, :].astype(o_ref.dtype))
        else:
            # Stage the next layer's input back into the shared slab
            # (only the valid rows; halo rows stay zero).
            for b in range(n_batch):
                slab[b * Lp + pad_l: b * Lp + pad_l + L, :cout] = (
                    acc[b * Lp:b * Lp + L, :])


def cn_forward(x_ncl, params, *, use_relu=True):
    """Forward pass of CN.  x_ncl: (N, Cin, L) as in PyTorch. Returns (N, out_dim, L).

    h_activ (ReLU) is applied after every hidden conv; the final conv has no
    activation.  dropout=0 / batch_norm=False (module defaults) -> identity.
    The entire stack runs in one pallas_call with intermediates kept in VMEM.
    """
    N, C0, L = x_ncl.shape
    n_layers = len(params)
    K = params[0][0].shape[-1]
    # PyTorch 'same' padding (stride=1, dilation=1): total=K-1, left=total//2.
    pad_l = (K - 1) // 2
    Lp = L + (K - 1)

    # NCL -> NLC -> flatten batch into the row dimension.
    x_2d = jnp.transpose(x_ncl, (0, 2, 1)).reshape(N * L, C0).astype(jnp.float32)

    inputs = [x_2d]
    in_specs = [pl.BlockSpec((N * L, C0), lambda i: (0, 0))]
    cmax = C0
    for (w, b) in params:
        Cout, Cin, Kw = w.shape
        assert Kw == K
        cmax = max(cmax, Cin)
        w_kic = jnp.transpose(w, (2, 1, 0))      # (K, Cin, Cout) tap-major
        b_2d = b.reshape(1, Cout)
        inputs += [w_kic, b_2d]
        in_specs += [
            pl.BlockSpec((Kw, Cin, Cout), lambda i: (0, 0, 0)),
            pl.BlockSpec((1, Cout), lambda i: (0, 0)),
        ]

    out_dim = params[-1][0].shape[0]
    kernel = functools.partial(
        _cn_fused_kernel, n_layers=n_layers, n_batch=N, L=L, K=K,
        pad_l=pad_l, use_relu=use_relu)

    out_2d = pl.pallas_call(
        kernel,
        out_shape=jax.ShapeDtypeStruct((N * L, out_dim), jnp.float32),
        grid_spec=pltpu.PrefetchScalarGridSpec(
            num_scalar_prefetch=0,
            grid=(1,),
            in_specs=in_specs,
            out_specs=pl.BlockSpec((N * L, out_dim), lambda i: (0, 0)),
            # Single shared padded staging slab reused by every layer.
            scratch_shapes=[pltpu.VMEM((N * Lp, cmax), jnp.float32)],
        ),
        compiler_params=pltpu.CompilerParams(
            dimension_semantics=("arbitrary",),
        ),
    )(*inputs)

    # (N*L, out_dim) -> (N, out_dim, L)  (back to PyTorch NCL)
    return jnp.transpose(out_2d.reshape(N, L, out_dim), (0, 2, 1))


def init_cn_params(key, in_channels, out_dim, channels, kernel_size):
    """Deterministic init matching the Conv1d stack shapes of CN.__init__."""
    params = []
    current = in_channels
    layer_channels = list(channels) + [out_dim]
    for out_ch in layer_channels:
        key, kw, kb = jax.random.split(key, 3)
        fan_in = current * kernel_size
        bound = 1.0 / math.sqrt(fan_in)
        w = jax.random.uniform(kw, (out_ch, current, kernel_size),
                               jnp.float32, -bound, bound)
        b = jax.random.uniform(kb, (out_ch,), jnp.float32, -bound, bound)
        params.append((w, b))
        current = out_ch
    return params


def cn_reference(x_ncl, params, *, use_relu=True):
    """Pure-JAX reference (lax conv, NCL layout, PyTorch semantics)."""
    x = x_ncl
    n_layers = len(params)
    for i, (w, b) in enumerate(params):
        K = w.shape[-1]
        pad_l = (K - 1) // 2
        pad_r = (K - 1) - pad_l
        y = lax.conv_general_dilated(
            x, w, window_strides=(1,), padding=[(pad_l, pad_r)],
            dimension_numbers=("NCH", "OIH", "NCH"))
        y = y + b[None, :, None]
        if use_relu and i != n_layers - 1:
            y = jnp.maximum(y, 0.0)
        x = y
    return x


if __name__ == "__main__":
    # Small config consistent with the module:
    #   CN(in_channels=4, out_dim=8, channels=[16, 16], kernel_size=3,
    #      h_activ=nn.ReLU(), dropout=0.0, batch_norm=False)
    N, Cin, L = 2, 4, 16
    out_dim = 8
    channels = [16, 16]
    kernel_size = 3

    key = jax.random.PRNGKey(0)
    key, kx = jax.random.split(key)
    x = jax.random.normal(kx, (N, Cin, L), jnp.float32)   # PyTorch NCL input

    params = init_cn_params(key, Cin, out_dim, channels, kernel_size)

    out = cn_forward(x, params, use_relu=True)
    out = jax.block_until_ready(out)

    ref = cn_reference(x, params, use_relu=True)
    assert out.shape == (N, out_dim, L), out.shape
    assert jnp.allclose(out, ref, atol=1e-5, rtol=1e-5), \
        float(jnp.max(jnp.abs(out - ref)))

    print("KERNEL_OK")
</pallas_src>

<mosaic_0001>
module attributes {stable_mosaic.version = 11 : i64} {
  func.func @_cn_fused_kernel(%arg0: i32, %arg1: memref<32x4xf32, #tpu.memory_space<vmem>>, %arg2: memref<3x4x16xf32, #tpu.memory_space<vmem>>, %arg3: memref<1x16xf32, #tpu.memory_space<vmem>>, %arg4: memref<3x16x16xf32, #tpu.memory_space<vmem>>, %arg5: memref<1x16xf32, #tpu.memory_space<vmem>>, %arg6: memref<3x16x8xf32, #tpu.memory_space<vmem>>, %arg7: memref<1x8xf32, #tpu.memory_space<vmem>>, %arg8: memref<32x8xf32, #tpu.memory_space<vmem>>, %arg9: memref<36x16xf32, #tpu.memory_space<vmem>>) attributes {dimension_semantics = [#tpu.dimension_semantics<arbitrary>], iteration_bounds = array<i64: 1>, scalar_prefetch = 0 : i64, scratch_operands = 1 : i64, tpu.core_type = #tpu.core_type<tc>, window_params = [{pipeline_mode = #tpu.pipeline_mode<synchronous>, transform_indices = @transform_0, window_bounds = array<i64: 32, 4>}, {pipeline_mode = #tpu.pipeline_mode<synchronous>, transform_indices = @transform_1, window_bounds = array<i64: 3, 4, 16>}, {pipeline_mode = #tpu.pipeline_mode<synchronous>, transform_indices = @transform_2, window_bounds = array<i64: 1, 16>}, {pipeline_mode = #tpu.pipeline_mode<synchronous>, transform_indices = @transform_3, window_bounds = array<i64: 3, 16, 16>}, {pipeline_mode = #tpu.pipeline_mode<synchronous>, transform_indices = @transform_4, window_bounds = array<i64: 1, 16>}, {pipeline_mode = #tpu.pipeline_mode<synchronous>, transform_indices = @transform_5, window_bounds = array<i64: 3, 16, 8>}, {pipeline_mode = #tpu.pipeline_mode<synchronous>, transform_indices = @transform_6, window_bounds = array<i64: 1, 8>}, {pipeline_mode = #tpu.pipeline_mode<synchronous>, transform_indices = @transform_7, window_bounds = array<i64: 32, 8>}]} {
    %cst = arith.constant 0.000000e+00 : f32
    %0 = vector.broadcast %cst : f32 to vector<36x16xf32>
    %c0 = arith.constant 0 : index
    %c0_0 = arith.constant 0 : index
    %1 = vector.load %arg9[%c0, %c0_0] : memref<36x16xf32, #tpu.memory_space<vmem>>, vector<36x16xf32>
    tpu.vector_store %arg9[%c0, %c0_0], %0 {strides = array<i32>} : memref<36x16xf32, #tpu.memory_space<vmem>>, vector<36x16xf32>,
    %c0_1 = arith.constant 0 : index
    %c0_2 = arith.constant 0 : index
    %2 = vector.load %arg1[%c0_1, %c0_2] : memref<32x4xf32, #tpu.memory_space<vmem>>, vector<16x4xf32>
    %c1 = arith.constant 1 : index
    %c0_3 = arith.constant 0 : index
    %3 = vector.load %arg9[%c1, %c0_3] : memref<36x16xf32, #tpu.memory_space<vmem>>, vector<16x4xf32>
    tpu.vector_store %arg9[%c1, %c0_3], %2 {strides = array<i32>} : memref<36x16xf32, #tpu.memory_space<vmem>>, vector<16x4xf32>,
    %c16 = arith.constant 16 : index
    %c0_4 = arith.constant 0 : index
    %4 = vector.load %arg1[%c16, %c0_4] : memref<32x4xf32, #tpu.memory_space<vmem>>, vector<16x4xf32>
    %c19 = arith.constant 19 : index
    %c0_5 = arith.constant 0 : index
    %5 = vector.load %arg9[%c19, %c0_5] : memref<36x16xf32, #tpu.memory_space<vmem>>, vector<16x4xf32>
    tpu.vector_store %arg9[%c19, %c0_5], %4 {strides = array<i32>} : memref<36x16xf32, #tpu.memory_space<vmem>>, vector<16x4xf32>,
    %c0_6 = arith.constant 0 : index
    %c0_7 = arith.constant 0 : index
    %6 = vector.load %arg9[%c0_6, %c0_7] : memref<36x16xf32, #tpu.memory_space<vmem>>, vector<36x4xf32>
    %cst_8 = arith.constant 0.000000e+00 : f32
    %7 = vector.broadcast %cst_8 : f32 to vector<34x16xf32>
    %8 = vector.extract_strided_slice %6 {offsets = [0, 0], sizes = [34, 4], strides = [1, 1]} : vector<36x4xf32> to vector<34x4xf32>
    %c0_9 = arith.constant 0 : index
    %c0_10 = arith.constant 0 : index
    %c0_11 = arith.constant 0 : index
    %9 = vector.load %arg2[%c0_9, %c0_10, %c0_11] : memref<3x4x16xf32, #tpu.memory_space<vmem>>, vector<1x4x16xf32>
    %10 = vector.shape_cast %9 : vector<1x4x16xf32> to vector<4x16xf32>
    %cst_12 = arith.constant dense<0.000000e+00> : vector<34x16xf32>
    %11 = tpu.matmul %8, %10, %cst_12 {dimension_numbers = #tpu.dot_dimension_numbers<[1], [0], [0], [1], [0, 0, 1, 1], [], []>} : vector<34x4xf32>, vector<4x16xf32>, vector<34x16xf32> -> vector<34x16xf32>
    %12 = arith.addf %7, %11 : vector<34x16xf32>
    %13 = vector.extract_strided_slice %6 {offsets = [1, 0], sizes = [34, 4], strides = [1, 1]} : vector<36x4xf32> to vector<34x4xf32>
    %c1_13 = arith.constant 1 : index
    %c0_14 = arith.constant 0 : index
    %c0_15 = arith.constant 0 : index
    %14 = vector.load %arg2[%c1_13, %c0_14, %c0_15] : memref<3x4x16xf32, #tpu.memory_space<vmem>>, vector<1x4x16xf32>
    %15 = vector.shape_cast %14 : vector<1x4x16xf32> to vector<4x16xf32>
    %cst_16 = arith.constant dense<0.000000e+00> : vector<34x16xf32>
    %16 = tpu.matmul %13, %15, %cst_16 {dimension_numbers = #tpu.dot_dimension_numbers<[1], [0], [0], [1], [0, 0, 1, 1], [], []>} : vector<34x4xf32>, vector<4x16xf32>, vector<34x16xf32> -> vector<34x16xf32>
    %17 = arith.addf %12, %16 : vector<34x16xf32>
    %18 = vector.extract_strided_slice %6 {offsets = [2, 0], sizes = [34, 4], strides = [1, 1]} : vector<36x4xf32> to vector<34x4xf32>
    %c2 = arith.constant 2 : index
    %c0_17 = arith.constant 0 : index
    %c0_18 = arith.constant 0 : index
    %19 = vector.load %arg2[%c2, %c0_17, %c0_18] : memref<3x4x16xf32, #tpu.memory_space<vmem>>, vector<1x4x16xf32>
    %20 = vector.shape_cast %19 : vector<1x4x16xf32> to vector<4x16xf32>
    %cst_19 = arith.constant dense<0.000000e+00> : vector<34x16xf32>
    %21 = tpu.matmul %18, %20, %cst_19 {dimension_numbers = #tpu.dot_dimension_numbers<[1], [0], [0], [1], [0, 0, 1, 1], [], []>} : vector<34x4xf32>, vector<4x16xf32>, vector<34x16xf32> -> vector<34x16xf32>
    %22 = arith.addf %17, %21 : vector<34x16xf32>
    %c0_20 = arith.constant 0 : index
    %c0_21 = arith.constant 0 : index
    %23 = vector.load %arg3[%c0_20, %c0_21] : memref<1x16xf32, #tpu.memory_space<vmem>>, vector<1x16xf32>
    %24 = vector.broadcast %23 : vector<1x16xf32> to vector<34x16xf32>
    %25 = arith.addf %22, %24 : vector<34x16xf32>
    %cst_22 = arith.constant 0.000000e+00 : f32
    %26 = vector.broadcast %cst_22 : f32 to vector<34x16xf32>
    %27 = arith.maximumf %25, %26 : vector<34x16xf32>
    %28 = vector.extract_strided_slice %27 {offsets = [0, 0], sizes = [16, 16], strides = [1, 1]} : vector<34x16xf32> to vector<16x16xf32>
    %c1_23 = arith.constant 1 : index
    %c0_24 = arith.constant 0 : index
    %29 = vector.load %arg9[%c1_23, %c0_24] : memref<36x16xf32, #tpu.memory_space<vmem>>, vector<16x16xf32>
    tpu.vector_store %arg9[%c1_23, %c0_24], %28 {strides = array<i32>} : memref<36x16xf32, #tpu.memory_space<vmem>>, vector<16x16xf32>,
    %30 = vector.extract_strided_slice %27 {offsets = [18, 0], sizes = [16, 16], strides = [1, 1]} : vector<34x16xf32> to vector<16x16xf32>
    %c19_25 = arith.constant 19 : index
    %c0_26 = arith.constant 0 : index
    %31 = vector.load %arg9[%c19_25, %c0_26] : memref<36x16xf32, #tpu.memory_space<vmem>>, vector<16x16xf32>
    tpu.vector_store %arg9[%c19_25, %c0_26], %30 {strides = array<i32>} : memref<36x16xf32, #tpu.memory_space<vmem>>, vector<16x16xf32>,
    %c0_27 = arith.constant 0 : index
    %c0_28 = arith.constant 0 : index
    %32 = vector.load %arg9[%c0_27, %c0_28] : memref<36x16xf32, #tpu.memory_space<vmem>>, vector<36x16xf32>
    %cst_29 = arith.constant 0.000000e+00 : f32
    %33 = vector.broadcast %cst_29 : f32 to vector<34x16xf32>
    %34 = vector.extract_strided_slice %32 {offsets = [0, 0], sizes = [34, 16], strides = [1, 1]} : vector<36x16xf32> to vector<34x16xf32>
    %c0_30 = arith.constant 0 : index
    %c0_31 = arith.constant 0 : index
    %c0_32 = arith.constant 0 : index
    %35 = vector.load %arg4[%c0_30, %c0_31, %c0_32] : memref<3x16x16xf32, #tpu.memory_space<vmem>>, vector<1x16x16xf32>
    %36 = vector.shape_cast %35 : vector<1x16x16xf32> to vector<16x16xf32>
    %cst_33 = arith.constant dense<0.000000e+00> : vector<34x16xf32>
    %37 = tpu.matmul %34, %36, %cst_33 {dimension_numbers = #tpu.dot_dimension_numbers<[1], [0], [0], [1], [0, 0, 1, 1], [], []>} : vector<34x16xf32>, vector<16x16xf32>, vector<34x16xf32> -> vector<34x16xf32>
    %38 = arith.addf %33, %37 : vector<34x16xf32>
    %39 = vector.extract_strided_slice %32 {offsets = [1, 0], sizes = [34, 16], strides = [1, 1]} : vector<36x16xf32> to vector<34x16xf32>
    %c1_34 = arith.constant 1 : index
    %c0_35 = arith.constant 0 : index
    %c0_36 = arith.constant 0 : index
    %40 = vector.load %arg4[%c1_34, %c0_35, %c0_36] : memref<3x16x16xf32, #tpu.memory_space<vmem>>, vector<1x16x16xf32>
    %41 = vector.shape_cast %40 : vector<1x16x16xf32> to vector<16x16xf32>
    %cst_37 = arith.constant dense<0.000000e+00> : vector<34x16xf32>
    %42 = tpu.matmul %39, %41, %cst_37 {dimension_numbers = #tpu.dot_dimension_numbers<[1], [0], [0], [1], [0, 0, 1, 1], [], []>} : vector<34x16xf32>, vector<16x16xf32>, vector<34x16xf32> -> vector<34x16xf32>
    %43 = arith.addf %38, %42 : vector<34x16xf32>
    %44 = vector.extract_strided_slice %32 {offsets = [2, 0], sizes = [34, 16], strides = [1, 1]} : vector<36x16xf32> to vector<34x16xf32>
    %c2_38 = arith.constant 2 : index
    %c0_39 = arith.constant 0 : index
    %c0_40 = arith.constant 0 : index
    %45 = vector.load %arg4[%c2_38, %c0_39, %c0_40] : memref<3x16x16xf32, #tpu.memory_space<vmem>>, vector<1x16x16xf32>
    %46 = vector.shape_cast %45 : vector<1x16x16xf32> to vector<16x16xf32>
    %cst_41 = arith.constant dense<0.000000e+00> : vector<34x16xf32>
    %47 = tpu.matmul %44, %46, %cst_41 {dimension_numbers = #tpu.dot_dimension_numbers<[1], [0], [0], [1], [0, 0, 1, 1], [], []>} : vector<34x16xf32>, vector<16x16xf32>, vector<34x16xf32> -> vector<34x16xf32>
    %48 = arith.addf %43, %47 : vector<34x16xf32>
    %c0_42 = arith.constant 0 : index
    %c0_43 = arith.constant 0 : index
    %49 = vector.load %arg5[%c0_42, %c0_43] : memref<1x16xf32, #tpu.memory_space<vmem>>, vector<1x16xf32>
    %50 = vector.broadcast %49 : vector<1x16xf32> to vector<34x16xf32>
    %51 = arith.addf %48, %50 : vector<34x16xf32>
    %cst_44 = arith.constant 0.000000e+00 : f32
    %52 = vector.broadcast %cst_44 : f32 to vector<34x16xf32>
    %53 = arith.maximumf %51, %52 : vector<34x16xf32>
    %54 = vector.extract_strided_slice %53 {offsets = [0, 0], sizes = [16, 16], strides = [1, 1]} : vector<34x16xf32> to vector<16x16xf32>
    %c1_45 = arith.constant 1 : index
    %c0_46 = arith.constant 0 : index
    %55 = vector.load %arg9[%c1_45, %c0_46] : memref<36x16xf32, #tpu.memory_space<vmem>>, vector<16x16xf32>
    tpu.vector_store %arg9[%c1_45, %c0_46], %54 {strides = array<i32>} : memref<36x16xf32, #tpu.memory_space<vmem>>, vector<16x16xf32>,
    %56 = vector.extract_strided_slice %53 {offsets = [18, 0], sizes = [16, 16], strides = [1, 1]} : vector<34x16xf32> to vector<16x16xf32>
    %c19_47 = arith.constant 19 : index
    %c0_48 = arith.constant 0 : index
    %57 = vector.load %arg9[%c19_47, %c0_48] : memref<36x16xf32, #tpu.memory_space<vmem>>, vector<16x16xf32>
    tpu.vector_store %arg9[%c19_47, %c0_48], %56 {strides = array<i32>} : memref<36x16xf32, #tpu.memory_space<vmem>>, vector<16x16xf32>,
    %c0_49 = arith.constant 0 : index
    %c0_50 = arith.constant 0 : index
    %58 = vector.load %arg9[%c0_49, %c0_50] : memref<36x16xf32, #tpu.memory_space<vmem>>, vector<36x16xf32>
    %cst_51 = arith.constant 0.000000e+00 : f32
    %59 = vector.broadcast %cst_51 : f32 to vector<34x8xf32>
    %60 = vector.extract_strided_slice %58 {offsets = [0, 0], sizes = [34, 16], strides = [1, 1]} : vector<36x16xf32> to vector<34x16xf32>
    %c0_52 = arith.constant 0 : index
    %c0_53 = arith.constant 0 : index
    %c0_54 = arith.constant 0 : index
    %61 = vector.load %arg6[%c0_52, %c0_53, %c0_54] : memref<3x16x8xf32, #tpu.memory_space<vmem>>, vector<1x16x8xf32>
    %62 = vector.shape_cast %61 : vector<1x16x8xf32> to vector<16x8xf32>
    %cst_55 = arith.constant dense<0.000000e+00> : vector<34x8xf32>
    %63 = tpu.matmul %60, %62, %cst_55 {dimension_numbers = #tpu.dot_dimension_numbers<[1], [0], [0], [1], [0, 0, 1, 1], [], []>} : vector<34x16xf32>, vector<16x8xf32>, vector<34x8xf32> -> vector<34x8xf32>
    %64 = arith.addf %59, %63 : vector<34x8xf32>
    %65 = vector.extract_strided_slice %58 {offsets = [1, 0], sizes = [34, 16], strides = [1, 1]} : vector<36x16xf32> to vector<34x16xf32>
    %c1_56 = arith.constant 1 : index
    %c0_57 = arith.constant 0 : index
    %c0_58 = arith.constant 0 : index
    %66 = vector.load %arg6[%c1_56, %c0_57, %c0_58] : memref<3x16x8xf32, #tpu.memory_space<vmem>>, vector<1x16x8xf32>
    %67 = vector.shape_cast %66 : vector<1x16x8xf32> to vector<16x8xf32>
    %cst_59 = arith.constant dense<0.000000e+00> : vector<34x8xf32>
    %68 = tpu.matmul %65, %67, %cst_59 {dimension_numbers = #tpu.dot_dimension_numbers<[1], [0], [0], [1], [0, 0, 1, 1], [], []>} : vector<34x16xf32>, vector<16x8xf32>, vector<34x8xf32> -> vector<34x8xf32>
    %69 = arith.addf %64, %68 : vector<34x8xf32>
    %70 = vector.extract_strided_slice %58 {offsets = [2, 0], sizes = [34, 16], strides = [1, 1]} : vector<36x16xf32> to vector<34x16xf32>
    %c2_60 = arith.constant 2 : index
    %c0_61 = arith.constant 0 : index
    %c0_62 = arith.constant 0 : index
    %71 = vector.load %arg6[%c2_60, %c0_61, %c0_62] : memref<3x16x8xf32, #tpu.memory_space<vmem>>, vector<1x16x8xf32>
    %72 = vector.shape_cast %71 : vector<1x16x8xf32> to vector<16x8xf32>
    %cst_63 = arith.constant dense<0.000000e+00> : vector<34x8xf32>
    %73 = tpu.matmul %70, %72, %cst_63 {dimension_numbers = #tpu.dot_dimension_numbers<[1], [0], [0], [1], [0, 0, 1, 1], [], []>} : vector<34x16xf32>, vector<16x8xf32>, vector<34x8xf32> -> vector<34x8xf32>
    %74 = arith.addf %69, %73 : vector<34x8xf32>
    %c0_64 = arith.constant 0 : index
    %c0_65 = arith.constant 0 : index
    %75 = vector.load %arg7[%c0_64, %c0_65] : memref<1x8xf32, #tpu.memory_space<vmem>>, vector<1x8xf32>
    %76 = vector.broadcast %75 : vector<1x8xf32> to vector<34x8xf32>
    %77 = arith.addf %74, %76 : vector<34x8xf32>
    %78 = vector.extract_strided_slice %77 {offsets = [0, 0], sizes = [16, 8], strides = [1, 1]} : vector<34x8xf32> to vector<16x8xf32>
    %c0_66 = arith.constant 0 : index
    %c0_67 = arith.constant 0 : index
    %79 = vector.load %arg8[%c0_66, %c0_67] : memref<32x8xf32, #tpu.memory_space<vmem>>, vector<16x8xf32>
    tpu.vector_store %arg8[%c0_66, %c0_67], %78 {strides = array<i32>} : memref<32x8xf32, #tpu.memory_space<vmem>>, vector<16x8xf32>,
    %80 = vector.extract_strided_slice %77 {offsets = [18, 0], sizes = [16, 8], strides = [1, 1]} : vector<34x8xf32> to vector<16x8xf32>
    %c16_68 = arith.constant 16 : index
    %c0_69 = arith.constant 0 : index
    %81 = vector.load %arg8[%c16_68, %c0_69] : memref<32x8xf32, #tpu.memory_space<vmem>>, vector<16x8xf32>
    tpu.vector_store %arg8[%c16_68, %c0_69], %80 {strides = array<i32>} : memref<32x8xf32, #tpu.memory_space<vmem>>, vector<16x8xf32>,
    return
  }
  func.func @transform_0(%arg0: i32) -> (i32, i32) {
    %c0_i32 = arith.constant 0 : i32
    %c0_i32_0 = arith.constant 0 : i32
    %c0_i32_1 = arith.constant 0 : i32
    return %c0_i32, %c0_i32_0 : i32, i32
  }
  func.func @transform_1(%arg0: i32) -> (i32, i32, i32) {
    %c0_i32 = arith.constant 0 : i32
    %c0_i32_0 = arith.constant 0 : i32
    %c0_i32_1 = arith.constant 0 : i32
    %c0_i32_2 = arith.constant 0 : i32
    return %c0_i32, %c0_i32_0, %c0_i32_1 : i32, i32, i32
  }
  func.func @transform_2(%arg0: i32) -> (i32, i32) {
    %c0_i32 = arith.constant 0 : i32
    %c0_i32_0 = arith.constant 0 : i32
    %c0_i32_1 = arith.constant 0 : i32
    return %c0_i32, %c0_i32_0 : i32, i32
  }
  func.func @transform_3(%arg0: i32) -> (i32, i32, i32) {
    %c0_i32 = arith.constant 0 : i32
    %c0_i32_0 = arith.constant 0 : i32
    %c0_i32_1 = arith.constant 0 : i32
    %c0_i32_2 = arith.constant 0 : i32
    return %c0_i32, %c0_i32_0, %c0_i32_1 : i32, i32, i32
  }
  func.func @transform_4(%arg0: i32) -> (i32, i32) {
    %c0_i32 = arith.constant 0 : i32
    %c0_i32_0 = arith.constant 0 : i32
    %c0_i32_1 = arith.constant 0 : i32
    return %c0_i32, %c0_i32_0 : i32, i32
  }
  func.func @transform_5(%arg0: i32) -> (i32, i32, i32) {
    %c0_i32 = arith.constant 0 : i32
    %c0_i32_0 = arith.constant 0 : i32
    %c0_i32_1 = arith.constant 0 : i32
    %c0_i32_2 = arith.constant 0 : i32
    return %c0_i32, %c0_i32_0, %c0_i32_1 : i32, i32, i32
  }
  func.func @transform_6(%arg0: i32) -> (i32, i32) {
    %c0_i32 = arith.constant 0 : i32
    %c0_i32_0 = arith.constant 0 : i32
    %c0_i32_1 = arith.constant 0 : i32
    return %c0_i32, %c0_i32_0 : i32, i32
  }
  func.func @transform_7(%arg0: i32) -> (i32, i32) {
    %c0_i32 = arith.constant 0 : i32
    %c0_i32_0 = arith.constant 0 : i32
    %c0_i32_1 = arith.constant 0 : i32
    return %c0_i32, %c0_i32_0 : i32, i32
  }
}

</mosaic_0001>

<llo_original>
// kernel: tpu_custom_call.1
$region0: #{tpu_custom_call.1}
  #allocation0 [shape = 'u32[]', space=smem, size = 0x4, offset = 0x4, fixed_abs, tag = 'smem constant byte address 0x4 - core index']
  #allocation1 [shape = 'u32[144,128]{1,0:T(1,128)}', space=vmem, size = 0x12000, scoped, tag = 'internal scratch']
  #allocation2 [shape = 'f32[36,16]{1,0:T(8,128)}', space=vmem, size = 0x5000, scoped, tag = 'scratch operand']
  %s0 = inlined_call_operand.vmem [shape: f32[32,4], index: 0, kind: input, shape index: {}]
  %s1 = inlined_call_operand.vmem [shape: f32[3,4,16], index: 1, kind: input, shape index: {}]
  %s2 = inlined_call_operand.vmem [shape: f32[1,16], index: 2, kind: input, shape index: {}]
  %s3 = inlined_call_operand.vmem [shape: f32[3,16,16], index: 3, kind: input, shape index: {}]
  %s4 = inlined_call_operand.vmem [shape: f32[1,16], index: 4, kind: input, shape index: {}]
  %s5 = inlined_call_operand.vmem [shape: f32[3,16,8], index: 5, kind: input, shape index: {}]
  %s6 = inlined_call_operand.vmem [shape: f32[1,8], index: 6, kind: input, shape index: {}]
  %s7 = inlined_call_operand.vmem [shape: f32[32,8], index: 7, kind: output, shape index: {}]
  %s8 = sld [smem:[#allocation0]]
  $region38: #{tpu_custom_call.1} parent=0
    _
  %s10 = ssub.s32 1, %s8
  %s11 = scalar_select 0, %s10, %s8
  // Predicated region
  $region2: #{tpu_custom_call.1} parent=0 // pred_check
    _
  $region3: #{tpu_custom_call.1} parent=0 // pred_check_branch
    %13 = sbr.rel (0) target = $region5
  $region4: #{tpu_custom_call.1} parent=0 // pred_region
    _
  $region5: #{tpu_custom_call.1} parent=0 // pred_fallthru
    _
  // Predicated region
  $region6: #{tpu_custom_call.1} parent=0 // pred_check
    _
  $region7: #{tpu_custom_call.1} parent=0 // pred_check_branch
    %15 = sbr.rel (0) target = $region9
  $region8: #{tpu_custom_call.1} parent=0 // pred_region
    _
  $region9: #{tpu_custom_call.1} parent=0 // pred_fallthru
    _
  // Predicated region
  $region10: #{tpu_custom_call.1} parent=0 // pred_check
    _
  $region11: #{tpu_custom_call.1} parent=0 // pred_check_branch
    %17 = sbr.rel (0) target = $region13
  $region12: #{tpu_custom_call.1} parent=0 // pred_region
    _
  $region13: #{tpu_custom_call.1} parent=0 // pred_fallthru
    _
  // Predicated region
  $region14: #{tpu_custom_call.1} parent=0 // pred_check
    _
  $region15: #{tpu_custom_call.1} parent=0 // pred_check_branch
    %19 = sbr.rel (0) target = $region17
  $region16: #{tpu_custom_call.1} parent=0 // pred_region
    _
  $region17: #{tpu_custom_call.1} parent=0 // pred_fallthru
    _
  // Predicated region
  $region18: #{tpu_custom_call.1} parent=0 // pred_check
    _
  $region19: #{tpu_custom_call.1} parent=0 // pred_check_branch
    %21 = sbr.rel (0) target = $region21
  $region20: #{tpu_custom_call.1} parent=0 // pred_region
    _
  $region21: #{tpu_custom_call.1} parent=0 // pred_fallthru
    _
  // Predicated region
  $region22: #{tpu_custom_call.1} parent=0 // pred_check
    _
  $region23: #{tpu_custom_call.1} parent=0 // pred_check_branch
    %23 = sbr.rel (0) target = $region25
  $region24: #{tpu_custom_call.1} parent=0 // pred_region
    _
  $region25: #{tpu_custom_call.1} parent=0 // pred_fallthru
    _
  // Predicated region
  $region26: #{tpu_custom_call.1} parent=0 // pred_check
    _
  $region27: #{tpu_custom_call.1} parent=0 // pred_check_branch
    %25 = sbr.rel (0) target = $region29
  $region28: #{tpu_custom_call.1} parent=0 // pred_region
    _
  $region29: #{tpu_custom_call.1} parent=0 // pred_fallthru
    _
  %vm26 = vcmask 130048
  %27 = vst.msk [vmem:[#allocation2] sm:$0xff] %vm26, 0.0
  %28 = vst.msk [vmem:[#allocation2 + $0x8] sm:$0xff] %vm26, 0.0
  %29 = vst.msk [vmem:[#allocation2 + $0x10] sm:$0xff] %vm26, 0.0
  %30 = vst.msk [vmem:[#allocation2 + $0x18] sm:$0xff] %vm26, 0.0
  %vm31 = vcmask 125952
  %32 = vst.msk [vmem:[#allocation2 + $0x20] sm:$0xf] %vm31, 0.0
  %v33 = vld [vmem:[%s0] sm:$0xff]
  %v34 = vld [vmem:[%s0 + $0x8] sm:$0xff]
  %vm35 = vcmask 31744
  %36 = vst.msk [vmem:[#allocation2 + $0x1] sm:$0xff] %vm35, %v33
  %37 = vst.msk [vmem:[#allocation2 + $0x9] sm:$0xff] %vm35, %v34
  %v38 = vld [vmem:[%s0 + $0x10] sm:$0xff]
  %v39 = vld [vmem:[%s0 + $0x18] sm:$0xff]
  %40 = vst.msk [vmem:[#allocation2 + $0x13] sm:$0xff] %vm35, %v38
  %41 = vst.msk [vmem:[#allocation2 + $0x1b] sm:$0xff] %vm35, %v39
  %v42 = vld [vmem:[#allocation2] sm:$0xff]
  %v43 = vld [vmem:[#allocation2 + $0x8] sm:$0xff]
  %v44 = vld [vmem:[#allocation2 + $0x10] sm:$0xff]
  %v45 = vld [vmem:[#allocation2 + $0x18] sm:$0xff]
  %v46 = vld [vmem:[#allocation2 + $0x20] sm:$0xf]
  %v47 = vld [vmem:[%s1] sm:$0xf]
  %s48 = scalar_lea.vmem %s1, 4
  %v49 = vld [vmem:[%s48] sm:$0xf]
  %vm55 = vcmask 1046528
  %v56 = vrot.slane %v42, 1
  %v57 = vrot.slane %v43, 1
  %v58 = vsel %vm55, %v56, %v57
  %v59 = vrot.slane %v44, 1
  %v60 = vsel %vm55, %v57, %v59
  %v61 = vrot.slane %v45, 1
  %v62 = vsel %vm55, %v59, %v61
  %v63 = vrot.slane %v46, 1
  %v64 = vsel %vm55, %v61, %v63
  %v65 = vsel %vm35, %v58, 0
  %v67 = vsel %vm35, %v60, 0
  %v69 = vsel %vm35, %v62, 0
  %v71 = vsel %vm35, %v64, 0
  %v73 = vsel %vm35, %v63, 0
  %vm75 = vcmask 1043456
  %v77 = vsel %vm75, %v49, 0
  %79 = vmatprep.subr.mxu0 0.0
  %80 = vmatpush1.msra.mxu0 0.0
  %81 = vmatprep.subr.mxu0 0.0
  %82 = vmatpush1.msra.mxu0 0.0
  %83 = vmatprep.subr.mxu0 0.0
  %84 = vmatpush1.msra.mxu0 0.0
  %85 = vmatprep.subr.mxu0 0.0
  %86 = vmatpush1.msra.mxu0 0.0
  %87 = vmatprep.subr.mxu0 0.0
  %88 = vmatpush1.msra.mxu0 0.0
  %89 = vmatprep.subr.mxu0 0.0
  %90 = vmatpush1.msra.mxu0 0.0
  %91 = vmatprep.subr.mxu0 0.0
  %92 = vmatpush1.msra.mxu0 0.0
  %93 = vmatprep.subr.mxu0 0.0
  %94 = vmatpush1.msra.mxu0 0.0
  %95 = vmatprep.subr.mxu0 0.0
  %96 = vmatpush1.msra.mxu0 0.0
  %97 = vmatprep.subr.mxu0 0.0
  %98 = vmatpush1.msra.mxu0 0.0
  %99 = vmatprep.subr.mxu0 0.0
  %100 = vmatpush1.msra.mxu0 0.0
  %101 = vmatprep.subr.mxu0 0.0
  %102 = vmatpush1.msra.mxu0 0.0
  %103 = vmatprep.subr.mxu0 0.0
  %104 = vmatpush1.msra.mxu0 0.0
  %105 = vmatprep.subr.mxu0 0.0
  %106 = vmatpush1.msra.mxu0 0.0
  %107 = vmatprep.subr.mxu0 0.0
  %108 = vmatpush1.msra.mxu0 0.0
  %109 = vmatprep.subr.mxu0 0.0
  %110 = vmatpush1.msra.mxu0 %v77
  %111 = vmatprep.subr.mxu0 0.0
  %112 = vmatpush2.msra.mxu0 0.0
  %113 = vmatprep.subr.mxu0 0.0
  %114 = vmatpush2.msra.mxu0 0.0
  %115 = vmatprep.subr.mxu0 0.0
  %116 = vmatpush2.msra.mxu0 0.0
  %117 = vmatprep.subr.mxu0 0.0
  %118 = vmatpush2.msra.mxu0 0.0
  %119 = vmatprep.subr.mxu0 0.0
  %120 = vmatpush2.msra.mxu0 0.0
  %121 = vmatprep.subr.mxu0 0.0
  %122 = vmatpush2.msra.mxu0 0.0
  %123 = vmatprep.subr.mxu0 0.0
  %124 = vmatpush2.msra.mxu0 0.0
  %125 = vmatprep.subr.mxu0 0.0
  %126 = vmatpush2.msra.mxu0 0.0
  %127 = vmatprep.subr.mxu0 0.0
  %128 = vmatpush2.msra.mxu0 0.0
  %129 = vmatprep.subr.mxu0 0.0
  %130 = vmatpush2.msra.mxu0 0.0
  %131 = vmatprep.subr.mxu0 0.0
  %132 = vmatpush2.msra.mxu0 0.0
  %133 = vmatprep.subr.mxu0 0.0
  %134 = vmatpush2.msra.mxu0 0.0
  %135 = vmatprep.subr.mxu0 0.0
  %136 = vmatpush2.msra.mxu0 0.0
  %137 = vmatprep.subr.mxu0 0.0
  %138 = vmatpush2.msra.mxu0 0.0
  %139 = vmatprep.subr.mxu0 0.0
  %140 = vmatpush2.msra.mxu0 0.0
  %141 = vmatprep.subr.mxu0 0.0
  %142 = vmatpush2.msra.mxu0 0.0
  %143 = vmatprep.mubr.f32.mxu0 0.0
  %144 = vmatmul.mubr.f32.gmra.mxu0 %v65
  %v145 = vpop.f32.mrf.mxu0
  %v146 = vadd.f32 0.0, %v145
  %v147 = vpop.f32.mrf.mxu0
  %148 = vmatprep.mubr.f32.mxu0 0.0
  %149 = vmatmul.mubr.f32.gmra.mxu0 %v67
  %v150 = vpop.f32.mrf.mxu0
  %v151 = vadd.f32 0.0, %v150
  %v152 = vpop.f32.mrf.mxu0
  %153 = vmatprep.mubr.f32.mxu0 0.0
  %154 = vmatmul.mubr.f32.gmra.mxu0 %v69
  %v155 = vpop.f32.mrf.mxu0
  %v156 = vadd.f32 0.0, %v155
  %v157 = vpop.f32.mrf.mxu0
  %158 = vmatprep.mubr.f32.mxu0 0.0
  %159 = vmatmul.mubr.f32.gmra.mxu0 %v71
  %v160 = vpop.f32.mrf.mxu0
  %v161 = vadd.f32 0.0, %v160
  %v162 = vpop.f32.mrf.mxu0
  %163 = vmatprep.mubr.f32.mxu0 0.0
  %164 = vmatmul.mubr.f32.gmra.mxu0 %v73
  %v165 = vpop.f32.mrf.mxu0
  %v166 = vadd.f32 0.0, %v165
  %v167 = vpop.f32.mrf.mxu0
  %168 = vdwg.mxu0
  %v169 = vsel %vm35, %v42, 0
  %v171 = vsel %vm35, %v43, 0
  %v173 = vsel %vm35, %v44, 0
  %v175 = vsel %vm35, %v45, 0
  %v177 = vsel %vm35, %v46, 0
  %v180 = vsel %vm75, %v47, 0
  %182 = vmatprep.subr.mxu0 0.0
  %183 = vmatpush1.msra.mxu0 0.0
  %184 = vmatprep.subr.mxu0 0.0
  %185 = vmatpush1.msra.mxu0 0.0
  %186 = vmatprep.subr.mxu0 0.0
  %187 = vmatpush1.msra.mxu0 0.0
  %188 = vmatprep.subr.mxu0 0.0
  %189 = vmatpush1.msra.mxu0 0.0
  %190 = vmatprep.subr.mxu0 0.0
  %191 = vmatpush1.msra.mxu0 0.0
  %192 = vmatprep.subr.mxu0 0.0
  %193 = vmatpush1.msra.mxu0 0.0
  %194 = vmatprep.subr.mxu0 0.0
  %195 = vmatpush1.msra.mxu0 0.0
  %196 = vmatprep.subr.mxu0 0.0
  %197 = vmatpush1.msra.mxu0 0.0
  %198 = vmatprep.subr.mxu0 0.0
  %199 = vmatpush1.msra.mxu0 0.0
  %200 = vmatprep.subr.mxu0 0.0
  %201 = vmatpush1.msra.mxu0 0.0
  %202 = vmatprep.subr.mxu0 0.0
  %203 = vmatpush1.msra.mxu0 0.0
  %204 = vmatprep.subr.mxu0 0.0
  %205 = vmatpush1.msra.mxu0 0.0
  %206 = vmatprep.subr.mxu0 0.0
  %207 = vmatpush1.msra.mxu0 0.0
  %208 = vmatprep.subr.mxu0 0.0
  %209 = vmatpush1.msra.mxu0 0.0
  %210 = vmatprep.subr.mxu0 0.0
  %211 = vmatpush1.msra.mxu0 0.0
  %212 = vmatprep.subr.mxu0 0.0
  %213 = vmatpush1.msra.mxu0 %v180
  %214 = vmatprep.subr.mxu0 0.0
  %215 = vmatpush2.msra.mxu0 0.0
  %216 = vmatprep.subr.mxu0 0.0
  %217 = vmatpush2.msra.mxu0 0.0
  %218 = vmatprep.subr.mxu0 0.0
  %219 = vmatpush2.msra.mxu0 0.0
  %220 = vmatprep.subr.mxu0 0.0
  %221 = vmatpush2.msra.mxu0 0.0
  %222 = vmatprep.subr.mxu0 0.0
  %223 = vmatpush2.msra.mxu0 0.0
  %224 = vmatprep.subr.mxu0 0.0
  %225 = vmatpush2.msra.mxu0 0.0
  %226 = vmatprep.subr.mxu0 0.0
  %227 = vmatpush2.msra.mxu0 0.0
  %228 = vmatprep.subr.mxu0 0.0
  %229 = vmatpush2.msra.mxu0 0.0
  %230 = vmatprep.subr.mxu0 0.0
  %231 = vmatpush2.msra.mxu0 0.0
  %232 = vmatprep.subr.mxu0 0.0
  %233 = vmatpush2.msra.mxu0 0.0
  %234 = vmatprep.subr.mxu0 0.0
  %235 = vmatpush2.msra.mxu0 0.0
  %236 = vmatprep.subr.mxu0 0.0
  %237 = vmatpush2.msra.mxu0 0.0
  %238 = vmatprep.subr.mxu0 0.0
  %239 = vmatpush2.msra.mxu0 0.0
  %240 = vmatprep.subr.mxu0 0.0
  %241 = vmatpush2.msra.mxu0 0.0
  %242 = vmatprep.subr.mxu0 0.0
  %243 = vmatpush2.msra.mxu0 0.0
  %244 = vmatprep.subr.mxu0 0.0
  %245 = vmatpush2.msra.mxu0 0.0
  %246 = vmatprep.mubr.f32.mxu0 0.0
  %247 = vmatmul.mubr.f32.gmra.mxu0 %v169
  %v248 = vpop.f32.mrf.mxu0
  %v249 = vadd.f32 %v146, %v248
  %v250 = vpop.f32.mrf.mxu0
  %251 = vmatprep.mubr.f32.mxu0 0.0
  %252 = vmatmul.mubr.f32.gmra.mxu0 %v171
  %v253 = vpop.f32.mrf.mxu0
  %v254 = vadd.f32 %v151, %v253
  %v255 = vpop.f32.mrf.mxu0
  %256 = vmatprep.mubr.f32.mxu0 0.0
  %257 = vmatmul.mubr.f32.gmra.mxu0 %v173
  %v258 = vpop.f32.mrf.mxu0
  %v259 = vadd.f32 %v156, %v258
  %v260 = vpop.f32.mrf.mxu0
  %261 = vmatprep.mubr.f32.mxu0 0.0
  %262 = vmatmul.mubr.f32.gmra.mxu0 %v175
  %v263 = vpop.f32.mrf.mxu0
  %v264 = vadd.f32 %v161, %v263
  %v265 = vpop.f32.mrf.mxu0
  %266 = vmatprep.mubr.f32.mxu0 0.0
  %267 = vmatmul.mubr.f32.gmra.mxu0 %v177
  %v268 = vpop.f32.mrf.mxu0
  %v269 = vadd.f32 %v166, %v268
  %v270 = vpop.f32.mrf.mxu0
  %271 = vdwg.mxu0
  %s272 = scalar_lea.vmem %s1, 8
  %v273 = vld [vmem:[%s272] sm:$0xf]
  %vm274 = vcmask 1045504
  %v275 = vrot.slane %v42, 2
  %v276 = vrot.slane %v43, 2
  %v277 = vsel %vm274, %v275, %v276
  %v278 = vrot.slane %v44, 2
  %v279 = vsel %vm274, %v276, %v278
  %v280 = vrot.slane %v45, 2
  %v281 = vsel %vm274, %v278, %v280
  %v282 = vrot.slane %v46, 2
  %v283 = vsel %vm274, %v280, %v282
  %v284 = vsel %vm35, %v277, 0
  %v286 = vsel %vm35, %v279, 0
  %v288 = vsel %vm35, %v281, 0
  %v290 = vsel %vm35, %v283, 0
  %v292 = vsel %vm35, %v282, 0
  %v295 = vsel %vm75, %v273, 0
  %297 = vmatprep.subr.mxu0 0.0
  %298 = vmatpush1.msra.mxu0 0.0
  %299 = vmatprep.subr.mxu0 0.0
  %300 = vmatpush1.msra.mxu0 0.0
  %301 = vmatprep.subr.mxu0 0.0
  %302 = vmatpush1.msra.mxu0 0.0
  %303 = vmatprep.subr.mxu0 0.0
  %304 = vmatpush1.msra.mxu0 0.0
  %305 = vmatprep.subr.mxu0 0.0
  %306 = vmatpush1.msra.mxu0 0.0
  %307 = vmatprep.subr.mxu0 0.0
  %308 = vmatpush1.msra.mxu0 0.0
  %309 = vmatprep.subr.mxu0 0.0
  %310 = vmatpush1.msra.mxu0 0.0
  %311 = vmatprep.subr.mxu0 0.0
  %312 = vmatpush1.msra.mxu0 0.0
  %313 = vmatprep.subr.mxu0 0.0
  %314 = vmatpush1.msra.mxu0 0.0
  %315 = vmatprep.subr.mxu0 0.0
  %316 = vmatpush1.msra.mxu0 0.0
  %317 = vmatprep.subr.mxu0 0.0
  %318 = vmatpush1.msra.mxu0 0.0
  %319 = vmatprep.subr.mxu0 0.0
  %320 = vmatpush1.msra.mxu0 0.0
  %321 = vmatprep.subr.mxu0 0.0
  %322 = vmatpush1.msra.mxu0 0.0
  %323 = vmatprep.subr.mxu0 0.0
  %324 = vmatpush1.msra.mxu0 0.0
  %325 = vmatprep.subr.mxu0 0.0
  %326 = vmatpush1.msra.mxu0 0.0
  %327 = vmatprep.subr.mxu0 0.0
  %328 = vmatpush1.msra.mxu0 %v295
  %329 = vmatprep.subr.mxu0 0.0
  %330 = vmatpush2.msra.mxu0 0.0
  %331 = vmatprep.subr.mxu0 0.0
  %332 = vmatpush2.msra.mxu0 0.0
  %333 = vmatprep.subr.mxu0 0.0
  %334 = vmatpush2.msra.mxu0 0.0
  %335 = vmatprep.subr.mxu0 0.0
  %336 = vmatpush2.msra.mxu0 0.0
  %337 = vmatprep.subr.mxu0 0.0
  %338 = vmatpush2.msra.mxu0 0.0
  %339 = vmatprep.subr.mxu0 0.0
  %340 = vmatpush2.msra.mxu0 0.0
  %341 = vmatprep.subr.mxu0 0.0
  %342 = vmatpush2.msra.mxu0 0.0
  %343 = vmatprep.subr.mxu0 0.0
  %344 = vmatpush2.msra.mxu0 0.0
  %345 = vmatprep.subr.mxu0 0.0
  %346 = vmatpush2.msra.mxu0 0.0
  %347 = vmatprep.subr.mxu0 0.0
  %348 = vmatpush2.msra.mxu0 0.0
  %349 = vmatprep.subr.mxu0 0.0
  %350 = vmatpush2.msra.mxu0 0.0
  %351 = vmatprep.subr.mxu0 0.0
  %352 = vmatpush2.msra.mxu0 0.0
  %353 = vmatprep.subr.mxu0 0.0
  %354 = vmatpush2.msra.mxu0 0.0
  %355 = vmatprep.subr.mxu0 0.0
  %356 = vmatpush2.msra.mxu0 0.0
  %357 = vmatprep.subr.mxu0 0.0
  %358 = vmatpush2.msra.mxu0 0.0
  %359 = vmatprep.subr.mxu0 0.0
  %360 = vmatpush2.msra.mxu0 0.0
  %361 = vmatprep.mubr.f32.mxu0 0.0
  %362 = vmatmul.mubr.f32.gmra.mxu0 %v284
  %v363 = vpop.f32.mrf.mxu0
  %v364 = vadd.f32 0.0, %v363
  %v365 = vpop.f32.mrf.mxu0
  %366 = vmatprep.mubr.f32.mxu0 0.0
  %367 = vmatmul.mubr.f32.gmra.mxu0 %v286
  %v368 = vpop.f32.mrf.mxu0
  %v369 = vadd.f32 0.0, %v368
  %v370 = vpop.f32.mrf.mxu0
  %371 = vmatprep.mubr.f32.mxu0 0.0
  %372 = vmatmul.mubr.f32.gmra.mxu0 %v288
  %v373 = vpop.f32.mrf.mxu0
  %v374 = vadd.f32 0.0, %v373
  %v375 = vpop.f32.mrf.mxu0
  %376 = vmatprep.mubr.f32.mxu0 0.0
  %377 = vmatmul.mubr.f32.gmra.mxu0 %v290
  %v378 = vpop.f32.mrf.mxu0
  %v379 = vadd.f32 0.0, %v378
  %v380 = vpop.f32.mrf.mxu0
  %381 = vmatprep.mubr.f32.mxu0 0.0
  %382 = vmatmul.mubr.f32.gmra.mxu0 %v292
  %v383 = vpop.f32.mrf.mxu0
  %v384 = vadd.f32 0.0, %v383
  %v385 = vpop.f32.mrf.mxu0
  %386 = vdwg.mxu0
  %v387 = vadd.f32 %v249, %v364
  %v388 = vadd.f32 %v254, %v369
  %v389 = vadd.f32 %v259, %v374
  %v390 = vadd.f32 %v264, %v379
  %v391 = vadd.f32 %v269, %v384
  %v392 = vld [vmem:[%s2] sm:$0x1]
  %v394 = vlaneseq
  %v395 = vshrl.u32 %v394, 7
  %v396 = vsub.s32 0, %v395
  %v397 = vrot.slane %v392, %v396
  %v399 = vadd.f32 %v387, %v397
  %v400 = vadd.f32 %v388, %v397
  %v401 = vadd.f32 %v389, %v397
  %v402 = vadd.f32 %v390, %v397
  %v403 = vadd.f32 %v391, %v397
  %v404 = vmax.f32 %v399, 0.0
  %v405 = vmax.f32 %v400, 0.0
  %v406 = vmax.f32 %v401, 0.0
  %v407 = vmax.f32 %v402, 0.0
  %v408 = vmax.f32 %v403, 0.0
  %409 = vst.msk [vmem:[#allocation2 + $0x1] sm:$0xff] %vm26, %v404
  %410 = vst.msk [vmem:[#allocation2 + $0x9] sm:$0xff] %vm26, %v405
  %vm411 = vcmask 130050
  %412 = vst.msk [vmem:[#allocation2 + $0x11] sm:$0xfc] %vm411, %v406
  %413 = vst.msk [vmem:[#allocation2 + $0x19] sm:$0xff] %vm26, %v407
  %vm414 = vcmask 123904
  %415 = vst.msk [vmem:[#allocation2 + $0x21] sm:$0x3] %vm414, %v408
  %v416 = vld [vmem:[#allocation2] sm:$0xff]
  %v417 = vld [vmem:[#allocation2 + $0x8] sm:$0xff]
  %v418 = vld [vmem:[#allocation2 + $0x10] sm:$0xff]
  %v419 = vld [vmem:[#allocation2 + $0x18] sm:$0xff]
  %v420 = vld [vmem:[#allocation2 + $0x20] sm:$0xf]
  %v421 = vld [vmem:[%s3] sm:$0xff]
  %v422 = vld [vmem:[%s3 + $0x8] sm:$0xff]
  %s423 = scalar_lea.vmem %s3, 16
  %v424 = vld [vmem:[%s423] sm:$0xff]
  %v425 = vld [vmem:[%s423 + $0x8] sm:$0xff]
  %v431 = vrot.slane %v416, 1
  %v432 = vrot.slane %v417, 1
  %v433 = vsel %vm55, %v431, %v432
  %v434 = vrot.slane %v418, 1
  %v435 = vsel %vm55, %v432, %v434
  %v436 = vrot.slane %v419, 1
  %v437 = vsel %vm55, %v434, %v436
  %v438 = vrot.slane %v420, 1
  %v439 = vsel %vm55, %v436, %v438
  %v440 = vsel %vm26, %v433, 0
  %v442 = vsel %vm26, %v435, 0
  %v444 = vsel %vm26, %v437, 0
  %v446 = vsel %vm26, %v439, 0
  %v448 = vsel %vm26, %v438, 0
  %450 = vmatprep.subr.mxu0 0.0
  %451 = vmatpush1.msra.mxu0 0.0
  %452 = vmatprep.subr.mxu0 0.0
  %453 = vmatpush1.msra.mxu0 0.0
  %454 = vmatprep.subr.mxu0 0.0
  %455 = vmatpush1.msra.mxu0 0.0
  %456 = vmatprep.subr.mxu0 0.0
  %457 = vmatpush1.msra.mxu0 0.0
  %458 = vmatprep.subr.mxu0 0.0
  %459 = vmatpush1.msra.mxu0 0.0
  %460 = vmatprep.subr.mxu0 0.0
  %461 = vmatpush1.msra.mxu0 0.0
  %462 = vmatprep.subr.mxu0 0.0
  %463 = vmatpush1.msra.mxu0 0.0
  %464 = vmatprep.subr.mxu0 0.0
  %465 = vmatpush1.msra.mxu0 0.0
  %466 = vmatprep.subr.mxu0 0.0
  %467 = vmatpush1.msra.mxu0 0.0
  %468 = vmatprep.subr.mxu0 0.0
  %469 = vmatpush1.msra.mxu0 0.0
  %470 = vmatprep.subr.mxu0 0.0
  %471 = vmatpush1.msra.mxu0 0.0
  %472 = vmatprep.subr.mxu0 0.0
  %473 = vmatpush1.msra.mxu0 0.0
  %474 = vmatprep.subr.mxu0 0.0
  %475 = vmatpush1.msra.mxu0 0.0
  %476 = vmatprep.subr.mxu0 0.0
  %477 = vmatpush1.msra.mxu0 0.0
  %478 = vmatprep.subr.mxu0 0.0
  %479 = vmatpush1.msra.mxu0 %v425
  %480 = vmatprep.subr.mxu0 0.0
  %481 = vmatpush1.msra.mxu0 %v424
  %482 = vmatprep.subr.mxu0 0.0
  %483 = vmatpush2.msra.mxu0 0.0
  %484 = vmatprep.subr.mxu0 0.0
  %485 = vmatpush2.msra.mxu0 0.0
  %486 = vmatprep.subr.mxu0 0.0
  %487 = vmatpush2.msra.mxu0 0.0
  %488 = vmatprep.subr.mxu0 0.0
  %489 = vmatpush2.msra.mxu0 0.0
  %490 = vmatprep.subr.mxu0 0.0
  %491 = vmatpush2.msra.mxu0 0.0
  %492 = vmatprep.subr.mxu0 0.0
  %493 = vmatpush2.msra.mxu0 0.0
  %494 = vmatprep.subr.mxu0 0.0
  %495 = vmatpush2.msra.mxu0 0.0
  %496 = vmatprep.subr.mxu0 0.0
  %497 = vmatpush2.msra.mxu0 0.0
  %498 = vmatprep.subr.mxu0 0.0
  %499 = vmatpush2.msra.mxu0 0.0
  %500 = vmatprep.subr.mxu0 0.0
  %501 = vmatpush2.msra.mxu0 0.0
  %502 = vmatprep.subr.mxu0 0.0
  %503 = vmatpush2.msra.mxu0 0.0
  %504 = vmatprep.subr.mxu0 0.0
  %505 = vmatpush2.msra.mxu0 0.0
  %506 = vmatprep.subr.mxu0 0.0
  %507 = vmatpush2.msra.mxu0 0.0
  %508 = vmatprep.subr.mxu0 0.0
  %509 = vmatpush2.msra.mxu0 0.0
  %510 = vmatprep.subr.mxu0 0.0
  %511 = vmatpush2.msra.mxu0 0.0
  %512 = vmatprep.subr.mxu0 0.0
  %513 = vmatpush2.msra.mxu0 0.0
  %514 = vmatprep.mubr.f32.mxu0 0.0
  %515 = vmatmul.mubr.f32.gmra.mxu0 %v440
  %v516 = vpop.f32.mrf.mxu0
  %v517 = vadd.f32 0.0, %v516
  %v518 = vpop.f32.mrf.mxu0
  %519 = vmatprep.mubr.f32.mxu0 0.0
  %520 = vmatmul.mubr.f32.gmra.mxu0 %v442
  %v521 = vpop.f32.mrf.mxu0
  %v522 = vadd.f32 0.0, %v521
  %v523 = vpop.f32.mrf.mxu0
  %524 = vmatprep.mubr.f32.mxu0 0.0
  %525 = vmatmul.mubr.f32.gmra.mxu0 %v444
  %v526 = vpop.f32.mrf.mxu0
  %v527 = vadd.f32 0.0, %v526
  %v528 = vpop.f32.mrf.mxu0
  %529 = vmatprep.mubr.f32.mxu0 0.0
  %530 = vmatmul.mubr.f32.gmra.mxu0 %v446
  %v531 = vpop.f32.mrf.mxu0
  %v532 = vadd.f32 0.0, %v531
  %v533 = vpop.f32.mrf.mxu0
  %534 = vmatprep.mubr.f32.mxu0 0.0
  %535 = vmatmul.mubr.f32.gmra.mxu0 %v448
  %v536 = vpop.f32.mrf.mxu0
  %v537 = vadd.f32 0.0, %v536
  %v538 = vpop.f32.mrf.mxu0
  %539 = vdwg.mxu0
  %v540 = vsel %vm26, %v416, 0
  %v542 = vsel %vm26, %v417, 0
  %v544 = vsel %vm26, %v418, 0
  %v546 = vsel %vm26, %v419, 0
  %v548 = vsel %vm26, %v420, 0
  %550 = vmatprep.subr.mxu0 0.0
  %551 = vmatpush1.msra.mxu0 0.0
  %552 = vmatprep.subr.mxu0 0.0
  %553 = vmatpush1.msra.mxu0 0.0
  %554 = vmatprep.subr.mxu0 0.0
  %555 = vmatpush1.msra.mxu0 0.0
  %556 = vmatprep.subr.mxu0 0.0
  %557 = vmatpush1.msra.mxu0 0.0
  %558 = vmatprep.subr.mxu0 0.0
  %559 = vmatpush1.msra.mxu0 0.0
  %560 = vmatprep.subr.mxu0 0.0
  %561 = vmatpush1.msra.mxu0 0.0
  %562 = vmatprep.subr.mxu0 0.0
  %563 = vmatpush1.msra.mxu0 0.0
  %564 = vmatprep.subr.mxu0 0.0
  %565 = vmatpush1.msra.mxu0 0.0
  %566 = vmatprep.subr.mxu0 0.0
  %567 = vmatpush1.msra.mxu0 0.0
  %568 = vmatprep.subr.mxu0 0.0
  %569 = vmatpush1.msra.mxu0 0.0
  %570 = vmatprep.subr.mxu0 0.0
  %571 = vmatpush1.msra.mxu0 0.0
  %572 = vmatprep.subr.mxu0 0.0
  %573 = vmatpush1.msra.mxu0 0.0
  %574 = vmatprep.subr.mxu0 0.0
  %575 = vmatpush1.msra.mxu0 0.0
  %576 = vmatprep.subr.mxu0 0.0
  %577 = vmatpush1.msra.mxu0 0.0
  %578 = vmatprep.subr.mxu0 0.0
  %579 = vmatpush1.msra.mxu0 %v422
  %580 = vmatprep.subr.mxu0 0.0
  %581 = vmatpush1.msra.mxu0 %v421
  %582 = vmatprep.subr.mxu0 0.0
  %583 = vmatpush2.msra.mxu0 0.0
  %584 = vmatprep.subr.mxu0 0.0
  %585 = vmatpush2.msra.mxu0 0.0
  %586 = vmatprep.subr.mxu0 0.0
  %587 = vmatpush2.msra.mxu0 0.0
  %588 = vmatprep.subr.mxu0 0.0
  %589 = vmatpush2.msra.mxu0 0.0
  %590 = vmatprep.subr.mxu0 0.0
  %591 = vmatpush2.msra.mxu0 0.0
  %592 = vmatprep.subr.mxu0 0.0
  %593 = vmatpush2.msra.mxu0 0.0
  %594 = vmatprep.subr.mxu0 0.0
  %595 = vmatpush2.msra.mxu0 0.0
  %596 = vmatprep.subr.mxu0 0.0
  %597 = vmatpush2.msra.mxu0 0.0
  %598 = vmatprep.subr.mxu0 0.0
  %599 = vmatpush2.msra.mxu0 0.0
  %600 = vmatprep.subr.mxu0 0.0
  %601 = vmatpush2.msra.mxu0 0.0
  %602 = vmatprep.subr.mxu0 0.0
  %603 = vmatpush2.msra.mxu0 0.0
  %604 = vmatprep.subr.mxu0 0.0
  %605 = vmatpush2.msra.mxu0 0.0
  %606 = vmatprep.subr.mxu0 0.0
  %607 = vmatpush2.msra.mxu0 0.0
  %608 = vmatprep.subr.mxu0 0.0
  %609 = vmatpush2.msra.mxu0 0.0
  %610 = vmatprep.subr.mxu0 0.0
  %611 = vmatpush2.msra.mxu0 0.0
  %612 = vmatprep.subr.mxu0 0.0
  %613 = vmatpush2.msra.mxu0 0.0
  %614 = vmatprep.mubr.f32.mxu0 0.0
  %615 = vmatmul.mubr.f32.gmra.mxu0 %v540
  %v616 = vpop.f32.mrf.mxu0
  %v617 = vadd.f32 %v517, %v616
  %v618 = vpop.f32.mrf.mxu0
  %619 = vmatprep.mubr.f32.mxu0 0.0
  %620 = vmatmul.mubr.f32.gmra.mxu0 %v542
  %v621 = vpop.f32.mrf.mxu0
  %v622 = vadd.f32 %v522, %v621
  %v623 = vpop.f32.mrf.mxu0
  %624 = vmatprep.mubr.f32.mxu0 0.0
  %625 = vmatmul.mubr.f32.gmra.mxu0 %v544
  %v626 = vpop.f32.mrf.mxu0
  %v627 = vadd.f32 %v527, %v626
  %v628 = vpop.f32.mrf.mxu0
  %629 = vmatprep.mubr.f32.mxu0 0.0
  %630 = vmatmul.mubr.f32.gmra.mxu0 %v546
  %v631 = vpop.f32.mrf.mxu0
  %v632 = vadd.f32 %v532, %v631
  %v633 = vpop.f32.mrf.mxu0
  %634 = vmatprep.mubr.f32.mxu0 0.0
  %635 = vmatmul.mubr.f32.gmra.mxu0 %v548
  %v636 = vpop.f32.mrf.mxu0
  %v637 = vadd.f32 %v537, %v636
  %v638 = vpop.f32.mrf.mxu0
  %639 = vdwg.mxu0
  %s640 = scalar_lea.vmem %s3, 32
  %v641 = vld [vmem:[%s640] sm:$0xff]
  %v642 = vld [vmem:[%s640 + $0x8] sm:$0xff]
  %v643 = vrot.slane %v416, 2
  %v644 = vrot.slane %v417, 2
  %v645 = vsel %vm274, %v643, %v644
  %v646 = vrot.slane %v418, 2
  %v647 = vsel %vm274, %v644, %v646
  %v648 = vrot.slane %v419, 2
  %v649 = vsel %vm274, %v646, %v648
  %v650 = vrot.slane %v420, 2
  %v651 = vsel %vm274, %v648, %v650
  %v652 = vsel %vm26, %v645, 0
  %v654 = vsel %vm26, %v647, 0
  %v656 = vsel %vm26, %v649, 0
  %v658 = vsel %vm26, %v651, 0
  %v660 = vsel %vm26, %v650, 0
  %662 = vmatprep.subr.mxu0 0.0
  %663 = vmatpush1.msra.mxu0 0.0
  %664 = vmatprep.subr.mxu0 0.0
  %665 = vmatpush1.msra.mxu0 0.0
  %666 = vmatprep.subr.mxu0 0.0
  %667 = vmatpush1.msra.mxu0 0.0
  %668 = vmatprep.subr.mxu0 0.0
  %669 = vmatpush1.msra.mxu0 0.0
  %670 = vmatprep.subr.mxu0 0.0
  %671 = vmatpush1.msra.mxu0 0.0
  %672 = vmatprep.subr.mxu0 0.0
  %673 = vmatpush1.msra.mxu0 0.0
  %674 = vmatprep.subr.mxu0 0.0
  %675 = vmatpush1.msra.mxu0 0.0
  %676 = vmatprep.subr.mxu0 0.0
  %677 = vmatpush1.msra.mxu0 0.0
  %678 = vmatprep.subr.mxu0 0.0
  %679 = vmatpush1.msra.mxu0 0.0
  %680 = vmatprep.subr.mxu0 0.0
  %681 = vmatpush1.msra.mxu0 0.0
  %682 = vmatprep.subr.mxu0 0.0
  %683 = vmatpush1.msra.mxu0 0.0
  %684 = vmatprep.subr.mxu0 0.0
  %685 = vmatpush1.msra.mxu0 0.0
  %686 = vmatprep.subr.mxu0 0.0
  %687 = vmatpush1.msra.mxu0 0.0
  %688 = vmatprep.subr.mxu0 0.0
  %689 = vmatpush1.msra.mxu0 0.0
  %690 = vmatprep.subr.mxu0 0.0
  %691 = vmatpush1.msra.mxu0 %v642
  %692 = vmatprep.subr.mxu0 0.0
  %693 = vmatpush1.msra.mxu0 %v641
  %694 = vmatprep.subr.mxu0 0.0
  %695 = vmatpush2.msra.mxu0 0.0
  %696 = vmatprep.subr.mxu0 0.0
  %697 = vmatpush2.msra.mxu0 0.0
  %698 = vmatprep.subr.mxu0 0.0
  %699 = vmatpush2.msra.mxu0 0.0
  %700 = vmatprep.subr.mxu0 0.0
  %701 = vmatpush2.msra.mxu0 0.0
  %702 = vmatprep.subr.mxu0 0.0
  %703 = vmatpush2.msra.mxu0 0.0
  %704 = vmatprep.subr.mxu0 0.0
  %705 = vmatpush2.msra.mxu0 0.0
  %706 = vmatprep.subr.mxu0 0.0
  %707 = vmatpush2.msra.mxu0 0.0
  %708 = vmatprep.subr.mxu0 0.0
  %709 = vmatpush2.msra.mxu0 0.0
  %710 = vmatprep.subr.mxu0 0.0
  %711 = vmatpush2.msra.mxu0 0.0
  %712 = vmatprep.subr.mxu0 0.0
  %713 = vmatpush2.msra.mxu0 0.0
  %714 = vmatprep.subr.mxu0 0.0
  %715 = vmatpush2.msra.mxu0 0.0
  %716 = vmatprep.subr.mxu0 0.0
  %717 = vmatpush2.msra.mxu0 0.0
  %718 = vmatprep.subr.mxu0 0.0
  %719 = vmatpush2.msra.mxu0 0.0
  %720 = vmatprep.subr.mxu0 0.0
  %721 = vmatpush2.msra.mxu0 0.0
  %722 = vmatprep.subr.mxu0 0.0
  %723 = vmatpush2.msra.mxu0 0.0
  %724 = vmatprep.subr.mxu0 0.0
  %725 = vmatpush2.msra.mxu0 0.0
  %726 = vmatprep.mubr.f32.mxu0 0.0
  %727 = vmatmul.mubr.f32.gmra.mxu0 %v652
  %v728 = vpop.f32.mrf.mxu0
  %v729 = vadd.f32 0.0, %v728
  %v730 = vpop.f32.mrf.mxu0
  %731 = vmatprep.mubr.f32.mxu0 0.0
  %732 = vmatmul.mubr.f32.gmra.mxu0 %v654
  %v733 = vpop.f32.mrf.mxu0
  %v734 = vadd.f32 0.0, %v733
  %v735 = vpop.f32.mrf.mxu0
  %736 = vmatprep.mubr.f32.mxu0 0.0
  %737 = vmatmul.mubr.f32.gmra.mxu0 %v656
  %v738 = vpop.f32.mrf.mxu0
  %v739 = vadd.f32 0.0, %v738
  %v740 = vpop.f32.mrf.mxu0
  %741 = vmatprep.mubr.f32.mxu0 0.0
  %742 = vmatmul.mubr.f32.gmra.mxu0 %v658
  %v743 = vpop.f32.mrf.mxu0
  %v744 = vadd.f32 0.0, %v743
  %v745 = vpop.f32.mrf.mxu0
  %746 = vmatprep.mubr.f32.mxu0 0.0
  %747 = vmatmul.mubr.f32.gmra.mxu0 %v660
  %v748 = vpop.f32.mrf.mxu0
  %v749 = vadd.f32 0.0, %v748
  %v750 = vpop.f32.mrf.mxu0
  %751 = vdwg.mxu0
  %v752 = vadd.f32 %v617, %v729
  %v753 = vadd.f32 %v622, %v734
  %v754 = vadd.f32 %v627, %v739
  %v755 = vadd.f32 %v632, %v744
  %v756 = vadd.f32 %v637, %v749
  %v757 = vld [vmem:[%s4] sm:$0x1]
  %v759 = vlaneseq
  %v760 = vshrl.u32 %v759, 7
  %v761 = vsub.s32 0, %v760
  %v762 = vrot.slane %v757, %v761
  %v764 = vadd.f32 %v752, %v762
  %v765 = vadd.f32 %v753, %v762
  %v766 = vadd.f32 %v754, %v762
  %v767 = vadd.f32 %v755, %v762
  %v768 = vadd.f32 %v756, %v762
  %v769 = vmax.f32 %v764, 0.0
  %v770 = vmax.f32 %v765, 0.0
  %v771 = vmax.f32 %v766, 0.0
  %v772 = vmax.f32 %v767, 0.0
  %v773 = vmax.f32 %v768, 0.0
  %774 = vst.msk [vmem:[#allocation2 + $0x1] sm:$0xff] %vm26, %v769
  %775 = vst.msk [vmem:[#allocation2 + $0x9] sm:$0xff] %vm26, %v770
  %776 = vst.msk [vmem:[#allocation2 + $0x11] sm:$0xfc] %vm411, %v771
  %777 = vst.msk [vmem:[#allocation2 + $0x19] sm:$0xff] %vm26, %v772
  %778 = vst.msk [vmem:[#allocation2 + $0x21] sm:$0x3] %vm414, %v773
  %v779 = vld [vmem:[#allocation2] sm:$0xff]
  %v780 = vld [vmem:[#allocation2 + $0x8] sm:$0xff]
  %v781 = vld [vmem:[#allocation2 + $0x10] sm:$0xff]
  %v782 = vld [vmem:[#allocation2 + $0x18] sm:$0xff]
  %v783 = vld [vmem:[#allocation2 + $0x20] sm:$0xf]
  %v784 = vld [vmem:[%s5] sm:$0xff]
  %v785 = vld [vmem:[%s5 + $0x8] sm:$0xff]
  %s786 = scalar_lea.vmem %s5, 16
  %v787 = vld [vmem:[%s786] sm:$0xff]
  %v788 = vld [vmem:[%s786 + $0x8] sm:$0xff]
  %v794 = vrot.slane %v779, 1
  %v795 = vrot.slane %v780, 1
  %v796 = vsel %vm55, %v794, %v795
  %v797 = vrot.slane %v781, 1
  %v798 = vsel %vm55, %v795, %v797
  %v799 = vrot.slane %v782, 1
  %v800 = vsel %vm55, %v797, %v799
  %v801 = vrot.slane %v783, 1
  %v802 = vsel %vm55, %v799, %v801
  %v803 = vsel %vm26, %v796, 0
  %v805 = vsel %vm26, %v798, 0
  %v807 = vsel %vm26, %v800, 0
  %v809 = vsel %vm26, %v802, 0
  %v811 = vsel %vm26, %v801, 0
  %813 = vmatprep.subr.mxu0 0.0
  %814 = vmatpush1.msra.mxu0 0.0
  %815 = vmatprep.subr.mxu0 0.0
  %816 = vmatpush1.msra.mxu0 0.0
  %817 = vmatprep.subr.mxu0 0.0
  %818 = vmatpush1.msra.mxu0 0.0
  %819 = vmatprep.subr.mxu0 0.0
  %820 = vmatpush1.msra.mxu0 0.0
  %821 = vmatprep.subr.mxu0 0.0
  %822 = vmatpush1.msra.mxu0 0.0
  %823 = vmatprep.subr.mxu0 0.0
  %824 = vmatpush1.msra.mxu0 0.0
  %825 = vmatprep.subr.mxu0 0.0
  %826 = vmatpush1.msra.mxu0 0.0
  %827 = vmatprep.subr.mxu0 0.0
  %828 = vmatpush1.msra.mxu0 0.0
  %829 = vmatprep.subr.mxu0 0.0
  %830 = vmatpush1.msra.mxu0 0.0
  %831 = vmatprep.subr.mxu0 0.0
  %832 = vmatpush1.msra.mxu0 0.0
  %833 = vmatprep.subr.mxu0 0.0
  %834 = vmatpush1.msra.mxu0 0.0
  %835 = vmatprep.subr.mxu0 0.0
  %836 = vmatpush1.msra.mxu0 0.0
  %837 = vmatprep.subr.mxu0 0.0
  %838 = vmatpush1.msra.mxu0 0.0
  %839 = vmatprep.subr.mxu0 0.0
  %840 = vmatpush1.msra.mxu0 0.0
  %841 = vmatprep.subr.mxu0 0.0
  %842 = vmatpush1.msra.mxu0 %v788
  %843 = vmatprep.subr.mxu0 0.0
  %844 = vmatpush1.msra.mxu0 %v787
  %845 = vmatprep.subr.mxu0 0.0
  %846 = vmatpush2.msra.mxu0 0.0
  %847 = vmatprep.subr.mxu0 0.0
  %848 = vmatpush2.msra.mxu0 0.0
  %849 = vmatprep.subr.mxu0 0.0
  %850 = vmatpush2.msra.mxu0 0.0
  %851 = vmatprep.subr.mxu0 0.0
  %852 = vmatpush2.msra.mxu0 0.0
  %853 = vmatprep.subr.mxu0 0.0
  %854 = vmatpush2.msra.mxu0 0.0
  %855 = vmatprep.subr.mxu0 0.0
  %856 = vmatpush2.msra.mxu0 0.0
  %857 = vmatprep.subr.mxu0 0.0
  %858 = vmatpush2.msra.mxu0 0.0
  %859 = vmatprep.subr.mxu0 0.0
  %860 = vmatpush2.msra.mxu0 0.0
  %861 = vmatprep.subr.mxu0 0.0
  %862 = vmatpush2.msra.mxu0 0.0
  %863 = vmatprep.subr.mxu0 0.0
  %864 = vmatpush2.msra.mxu0 0.0
  %865 = vmatprep.subr.mxu0 0.0
  %866 = vmatpush2.msra.mxu0 0.0
  %867 = vmatprep.subr.mxu0 0.0
  %868 = vmatpush2.msra.mxu0 0.0
  %869 = vmatprep.subr.mxu0 0.0
  %870 = vmatpush2.msra.mxu0 0.0
  %871 = vmatprep.subr.mxu0 0.0
  %872 = vmatpush2.msra.mxu0 0.0
  %873 = vmatprep.subr.mxu0 0.0
  %874 = vmatpush2.msra.mxu0 0.0
  %875 = vmatprep.subr.mxu0 0.0
  %876 = vmatpush2.msra.mxu0 0.0
  %877 = vmatprep.mubr.f32.mxu0 0.0
  %878 = vmatmul.mubr.f32.gmra.mxu0 %v803
  %v879 = vpop.f32.mrf.mxu0
  %v880 = vadd.f32 0.0, %v879
  %v881 = vpop.f32.mrf.mxu0
  %882 = vmatprep.mubr.f32.mxu0 0.0
  %883 = vmatmul.mubr.f32.gmra.mxu0 %v805
  %v884 = vpop.f32.mrf.mxu0
  %v885 = vadd.f32 0.0, %v884
  %v886 = vpop.f32.mrf.mxu0
  %887 = vmatprep.mubr.f32.mxu0 0.0
  %888 = vmatmul.mubr.f32.gmra.mxu0 %v807
  %v889 = vpop.f32.mrf.mxu0
  %v890 = vadd.f32 0.0, %v889
  %v891 = vpop.f32.mrf.mxu0
  %892 = vmatprep.mubr.f32.mxu0 0.0
  %893 = vmatmul.mubr.f32.gmra.mxu0 %v809
  %v894 = vpop.f32.mrf.mxu0
  %v895 = vadd.f32 0.0, %v894
  %v896 = vpop.f32.mrf.mxu0
  %897 = vmatprep.mubr.f32.mxu0 0.0
  %898 = vmatmul.mubr.f32.gmra.mxu0 %v811
  %v899 = vpop.f32.mrf.mxu0
  %v900 = vadd.f32 0.0, %v899
  %v901 = vpop.f32.mrf.mxu0
  %902 = vdwg.mxu0
  %v903 = vsel %vm26, %v779, 0
  %v905 = vsel %vm26, %v780, 0
  %v907 = vsel %vm26, %v781, 0
  %v909 = vsel %vm26, %v782, 0
  %v911 = vsel %vm26, %v783, 0
  %913 = vmatprep.subr.mxu0 0.0
  %914 = vmatpush1.msra.mxu0 0.0
  %915 = vmatprep.subr.mxu0 0.0
  %916 = vmatpush1.msra.mxu0 0.0
  %917 = vmatprep.subr.mxu0 0.0
  %918 = vmatpush1.msra.mxu0 0.0
  %919 = vmatprep.subr.mxu0 0.0
  %920 = vmatpush1.msra.mxu0 0.0
  %921 = vmatprep.subr.mxu0 0.0
  %922 = vmatpush1.msra.mxu0 0.0
  %923 = vmatprep.subr.mxu0 0.0
  %924 = vmatpush1.msra.mxu0 0.0
  %925 = vmatprep.subr.mxu0 0.0
  %926 = vmatpush1.msra.mxu0 0.0
  %927 = vmatprep.subr.mxu0 0.0
  %928 = vmatpush1.msra.mxu0 0.0
  %929 = vmatprep.subr.mxu0 0.0
  %930 = vmatpush1.msra.mxu0 0.0
  %931 = vmatprep.subr.mxu0 0.0
  %932 = vmatpush1.msra.mxu0 0.0
  %933 = vmatprep.subr.mxu0 0.0
  %934 = vmatpush1.msra.mxu0 0.0
  %935 = vmatprep.subr.mxu0 0.0
  %936 = vmatpush1.msra.mxu0 0.0
  %937 = vmatprep.subr.mxu0 0.0
  %938 = vmatpush1.msra.mxu0 0.0
  %939 = vmatprep.subr.mxu0 0.0
  %940 = vmatpush1.msra.mxu0 0.0
  %941 = vmatprep.subr.mxu0 0.0
  %942 = vmatpush1.msra.mxu0 %v785
  %943 = vmatprep.subr.mxu0 0.0
  %944 = vmatpush1.msra.mxu0 %v784
  %945 = vmatprep.subr.mxu0 0.0
  %946 = vmatpush2.msra.mxu0 0.0
  %947 = vmatprep.subr.mxu0 0.0
  %948 = vmatpush2.msra.mxu0 0.0
  %949 = vmatprep.subr.mxu0 0.0
  %950 = vmatpush2.msra.mxu0 0.0
  %951 = vmatprep.subr.mxu0 0.0
  %952 = vmatpush2.msra.mxu0 0.0
  %953 = vmatprep.subr.mxu0 0.0
  %954 = vmatpush2.msra.mxu0 0.0
  %955 = vmatprep.subr.mxu0 0.0
  %956 = vmatpush2.msra.mxu0 0.0
  %957 = vmatprep.subr.mxu0 0.0
  %958 = vmatpush2.msra.mxu0 0.0
  %959 = vmatprep.subr.mxu0 0.0
  %960 = vmatpush2.msra.mxu0 0.0
  %961 = vmatprep.subr.mxu0 0.0
  %962 = vmatpush2.msra.mxu0 0.0
  %963 = vmatprep.subr.mxu0 0.0
  %964 = vmatpush2.msra.mxu0 0.0
  %965 = vmatprep.subr.mxu0 0.0
  %966 = vmatpush2.msra.mxu0 0.0
  %967 = vmatprep.subr.mxu0 0.0
  %968 = vmatpush2.msra.mxu0 0.0
  %969 = vmatprep.subr.mxu0 0.0
  %970 = vmatpush2.msra.mxu0 0.0
  %971 = vmatprep.subr.mxu0 0.0
  %972 = vmatpush2.msra.mxu0 0.0
  %973 = vmatprep.subr.mxu0 0.0
  %974 = vmatpush2.msra.mxu0 0.0
  %975 = vmatprep.subr.mxu0 0.0
  %976 = vmatpush2.msra.mxu0 0.0
  %977 = vmatprep.mubr.f32.mxu0 0.0
  %978 = vmatmul.mubr.f32.gmra.mxu0 %v903
  %v979 = vpop.f32.mrf.mxu0
  %v980 = vadd.f32 %v880, %v979
  %v981 = vpop.f32.mrf.mxu0
  %982 = vmatprep.mubr.f32.mxu0 0.0
  %983 = vmatmul.mubr.f32.gmra.mxu0 %v905
  %v984 = vpop.f32.mrf.mxu0
  %v985 = vadd.f32 %v885, %v984
  %v986 = vpop.f32.mrf.mxu0
  %987 = vmatprep.mubr.f32.mxu0 0.0
  %988 = vmatmul.mubr.f32.gmra.mxu0 %v907
  %v989 = vpop.f32.mrf.mxu0
  %v990 = vadd.f32 %v890, %v989
  %v991 = vpop.f32.mrf.mxu0
  %992 = vmatprep.mubr.f32.mxu0 0.0
  %993 = vmatmul.mubr.f32.gmra.mxu0 %v909
  %v994 = vpop.f32.mrf.mxu0
  %v995 = vadd.f32 %v895, %v994
  %v996 = vpop.f32.mrf.mxu0
  %997 = vmatprep.mubr.f32.mxu0 0.0
  %998 = vmatmul.mubr.f32.gmra.mxu0 %v911
  %v999 = vpop.f32.mrf.mxu0
  %v1000 = vadd.f32 %v900, %v999
  %v1001 = vpop.f32.mrf.mxu0
  %1002 = vdwg.mxu0
  %s1003 = scalar_lea.vmem %s5, 32
  %v1004 = vld [vmem:[%s1003] sm:$0xff]
  %v1005 = vld [vmem:[%s1003 + $0x8] sm:$0xff]
  %v1006 = vrot.slane %v779, 2
  %v1007 = vrot.slane %v780, 2
  %v1008 = vsel %vm274, %v1006, %v1007
  %v1009 = vrot.slane %v781, 2
  %v1010 = vsel %vm274, %v1007, %v1009
  %v1011 = vrot.slane %v782, 2
  %v1012 = vsel %vm274, %v1009, %v1011
  %v1013 = vrot.slane %v783, 2
  %v1014 = vsel %vm274, %v1011, %v1013
  %v1015 = vsel %vm26, %v1008, 0
  %v1017 = vsel %vm26, %v1010, 0
  %v1019 = vsel %vm26, %v1012, 0
  %v1021 = vsel %vm26, %v1014, 0
  %v1023 = vsel %vm26, %v1013, 0
  %1025 = vmatprep.subr.mxu0 0.0
  %1026 = vmatpush1.msra.mxu0 0.0
  %1027 = vmatprep.subr.mxu0 0.0
  %1028 = vmatpush1.msra.mxu0 0.0
  %1029 = vmatprep.subr.mxu0 0.0
  %1030 = vmatpush1.msra.mxu0 0.0
  %1031 = vmatprep.subr.mxu0 0.0
  %1032 = vmatpush1.msra.mxu0 0.0
  %1033 = vmatprep.subr.mxu0 0.0
  %1034 = vmatpush1.msra.mxu0 0.0
  %1035 = vmatprep.subr.mxu0 0.0
  %1036 = vmatpush1.msra.mxu0 0.0
  %1037 = vmatprep.subr.mxu0 0.0
  %1038 = vmatpush1.msra.mxu0 0.0
  %1039 = vmatprep.subr.mxu0 0.0
  %1040 = vmatpush1.msra.mxu0 0.0
  %1041 = vmatprep.subr.mxu0 0.0
  %1042 = vmatpush1.msra.mxu0 0.0
  %1043 = vmatprep.subr.mxu0 0.0
  %1044 = vmatpush1.msra.mxu0 0.0
  %1045 = vmatprep.subr.mxu0 0.0
  %1046 = vmatpush1.msra.mxu0 0.0
  %1047 = vmatprep.subr.mxu0 0.0
  %1048 = vmatpush1.msra.mxu0 0.0
  %1049 = vmatprep.subr.mxu0 0.0
  %1050 = vmatpush1.msra.mxu0 0.0
  %1051 = vmatprep.subr.mxu0 0.0
  %1052 = vmatpush1.msra.mxu0 0.0
  %1053 = vmatprep.subr.mxu0 0.0
  %1054 = vmatpush1.msra.mxu0 %v1005
  %1055 = vmatprep.subr.mxu0 0.0
  %1056 = vmatpush1.msra.mxu0 %v1004
  %1057 = vmatprep.subr.mxu0 0.0
  %1058 = vmatpush2.msra.mxu0 0.0
  %1059 = vmatprep.subr.mxu0 0.0
  %1060 = vmatpush2.msra.mxu0 0.0
  %1061 = vmatprep.subr.mxu0 0.0
  %1062 = vmatpush2.msra.mxu0 0.0
  %1063 = vmatprep.subr.mxu0 0.0
  %1064 = vmatpush2.msra.mxu0 0.0
  %1065 = vmatprep.subr.mxu0 0.0
  %1066 = vmatpush2.msra.mxu0 0.0
  %1067 = vmatprep.subr.mxu0 0.0
  %1068 = vmatpush2.msra.mxu0 0.0
  %1069 = vmatprep.subr.mxu0 0.0
  %1070 = vmatpush2.msra.mxu0 0.0
  %1071 = vmatprep.subr.mxu0 0.0
  %1072 = vmatpush2.msra.mxu0 0.0
  %1073 = vmatprep.subr.mxu0 0.0
  %1074 = vmatpush2.msra.mxu0 0.0
  %1075 = vmatprep.subr.mxu0 0.0
  %1076 = vmatpush2.msra.mxu0 0.0
  %1077 = vmatprep.subr.mxu0 0.0
  %1078 = vmatpush2.msra.mxu0 0.0
  %1079 = vmatprep.subr.mxu0 0.0
  %1080 = vmatpush2.msra.mxu0 0.0
  %1081 = vmatprep.subr.mxu0 0.0
  %1082 = vmatpush2.msra.mxu0 0.0
  %1083 = vmatprep.subr.mxu0 0.0
  %1084 = vmatpush2.msra.mxu0 0.0
  %1085 = vmatprep.subr.mxu0 0.0
  %1086 = vmatpush2.msra.mxu0 0.0
  %1087 = vmatprep.subr.mxu0 0.0
  %1088 = vmatpush2.msra.mxu0 0.0
  %1089 = vmatprep.mubr.f32.mxu0 0.0
  %1090 = vmatmul.mubr.f32.gmra.mxu0 %v1015
  %v1091 = vpop.f32.mrf.mxu0
  %v1092 = vadd.f32 0.0, %v1091
  %v1093 = vpop.f32.mrf.mxu0
  %1094 = vmatprep.mubr.f32.mxu0 0.0
  %1095 = vmatmul.mubr.f32.gmra.mxu0 %v1017
  %v1096 = vpop.f32.mrf.mxu0
  %v1097 = vadd.f32 0.0, %v1096
  %v1098 = vpop.f32.mrf.mxu0
  %1099 = vmatprep.mubr.f32.mxu0 0.0
  %1100 = vmatmul.mubr.f32.gmra.mxu0 %v1019
  %v1101 = vpop.f32.mrf.mxu0
  %v1102 = vadd.f32 0.0, %v1101
  %v1103 = vpop.f32.mrf.mxu0
  %1104 = vmatprep.mubr.f32.mxu0 0.0
  %1105 = vmatmul.mubr.f32.gmra.mxu0 %v1021
  %v1106 = vpop.f32.mrf.mxu0
  %v1107 = vadd.f32 0.0, %v1106
  %v1108 = vpop.f32.mrf.mxu0
  %1109 = vmatprep.mubr.f32.mxu0 0.0
  %1110 = vmatmul.mubr.f32.gmra.mxu0 %v1023
  %v1111 = vpop.f32.mrf.mxu0
  %v1112 = vadd.f32 0.0, %v1111
  %v1113 = vpop.f32.mrf.mxu0
  %1114 = vdwg.mxu0
  %v1115 = vadd.f32 %v980, %v1092
  %v1116 = vadd.f32 %v985, %v1097
  %v1117 = vadd.f32 %v990, %v1102
  %v1118 = vadd.f32 %v995, %v1107
  %v1119 = vadd.f32 %v1000, %v1112
  %v1120 = vld [vmem:[%s6] sm:$0x1]
  %v1122 = vlaneseq
  %v1123 = vshrl.u32 %v1122, 7
  %v1124 = vsub.s32 0, %v1123
  %v1125 = vrot.slane %v1120, %v1124
  %v1127 = vadd.f32 %v1115, %v1125
  %v1128 = vadd.f32 %v1116, %v1125
  %v1129 = vadd.f32 %v1117, %v1125
  %v1130 = vadd.f32 %v1118, %v1125
  %v1131 = vadd.f32 %v1119, %v1125
  %vm1132 = vcmask 64512
  %1133 = vst.msk [vmem:[%s7] sm:$0xff] %vm1132, %v1127
  %1134 = vst.msk [vmem:[%s7 + $0x8] sm:$0xff] %vm1132, %v1128
  %vm1135 = vcmask 64514
  %1136 = vst.msk [vmem:[%s7 + $0xe] sm:$0xfc] %vm1135, %v1129
  %1137 = vst.msk [vmem:[%s7 + $0x16] sm:$0xff] %vm1132, %v1130
  %vm1138 = vcmask 58368
  %1139 = vst.msk [vmem:[%s7 + $0x1e] sm:$0x3] %vm1138, %v1131
  // Predicated region
  $region30: #{tpu_custom_call.1} parent=0 // pred_check
    _
  $region31: #{tpu_custom_call.1} parent=0 // pred_check_branch
    %1141 = sbr.rel (0) target = $region33
  $region32: #{tpu_custom_call.1} parent=0 // pred_region
    _
  $region33: #{tpu_custom_call.1} parent=0 // pred_fallthru
    _
  // Predicated region
  $region34: #{tpu_custom_call.1} parent=0 // pred_check
    _
  $region35: #{tpu_custom_call.1} parent=0 // pred_check_branch
    %1143 = sbr.rel (0) target = $region37
  $region36: #{tpu_custom_call.1} parent=0 // pred_region
    _
  $region37: #{tpu_custom_call.1} parent=0 // pred_fallthru
    _

</llo_original>
